<compile_context>
chip_gen: v7x
topology: tpu7x:2x2x1
jax: 0.10.0
libtpu: 0.0.40
codegen_flags: <defaults>
</compile_context>

<pallas_src>
import functools

import jax
import jax.numpy as jnp
from jax.experimental import pallas as pl
from jax.experimental.pallas import tpu as pltpu


def _round_up(n, m):
    return ((n + m - 1) // m) * m


def _cdiv(a, b):
    return (a + b - 1) // b


def encoder_kernel(x_ref, w1_ref, b1_ref, w2_ref, b2_ref, o_ref):
    # linear1 + relu (f32 accumulator regardless of operand dtype)
    h = jnp.dot(x_ref[...], w1_ref[...], preferred_element_type=jnp.float32)
    h = jnp.maximum(h + b1_ref[...], 0.0)          # b1 is (1, H) -> broadcasts
    # linear2 + relu (h rounded to the operand dtype before the second matmul)
    y = jnp.dot(h.astype(w2_ref.dtype), w2_ref[...],
                preferred_element_type=jnp.float32)
    y = jnp.maximum(y + b2_ref[...], 0.0)          # b2 is (1, D_out)
    o_ref[...] = y.astype(o_ref.dtype)


@functools.partial(
    jax.jit, static_argnames=("block_rows", "compute_dtype", "out_dtype"))
def encoder_forward(x, w1, b1, w2, b2, *, block_rows=4096,
                    compute_dtype=jnp.bfloat16, out_dtype=None):
    """x: [B, D_in], w1: [D_in, H], b1: [H], w2: [H, D_out], b2: [D_out].

    compute_dtype: dtype for the matmul operands (default bf16 — valid on
      v5e/v6e/v7x MXUs).  None keeps x's dtype.  Accumulation / bias / ReLU
      are always float32.
    out_dtype: output dtype; defaults to the input x dtype.
    """
    B, D_in = x.shape
    H = w1.shape[1]
    D_out = w2.shape[1]
    out_dtype = out_dtype if out_dtype is not None else x.dtype

    if compute_dtype is not None:
        x = x.astype(compute_dtype)
        w1 = w1.astype(compute_dtype)
        w2 = w2.astype(compute_dtype)
    # Biases live on the f32 accumulator path.
    b1_2d = b1.astype(jnp.float32).reshape(1, H)
    b2_2d = b2.astype(jnp.float32).reshape(1, D_out)

    # ---- Batch tiling -------------------------------------------------------
    # Large tiles amortize the ~0.35 us per-grid-step overhead; tm is derived
    # from the step count so pad waste is at most one sublane group per step.
    sub = 16 if jnp.dtype(x.dtype) == jnp.dtype(jnp.bfloat16) else 8
    b_sub = _round_up(B, sub)
    tm_max = max(_round_up(block_rows, sub), sub)
    steps = _cdiv(b_sub, tm_max)
    if steps == 1 and b_sub >= 512:
        # v7x has 2 TensorCores: force >= 2 grid steps (each still >= 256
        # rows) so the "parallel" batch axis feeds both.  No-op on v5e/v6e.
        steps = 2
    tm = _round_up(_cdiv(b_sub, steps), sub)
    grid_steps = _cdiv(b_sub, tm)
    b_pad = grid_steps * tm
    if b_pad != B:
        x = jnp.pad(x, ((0, b_pad - B), (0, 0)))
    grid = (grid_steps,)

    # ---- VMEM budget from the real (8,128)-padded buffer footprint ----------
    def lane_pad(n):
        return _round_up(max(n, 1), 128)

    x_item = jnp.dtype(x.dtype).itemsize
    w_item = jnp.dtype(w1.dtype).itemsize
    o_item = jnp.dtype(out_dtype).itemsize
    vmem_est = (
        2 * _round_up(tm, 8) * lane_pad(D_in) * x_item            # x, 2 buffers
        + 2 * _round_up(tm, 8) * lane_pad(D_out) * o_item         # out, 2 buffers
        + 2 * (_round_up(D_in, 8) * lane_pad(H)
               + _round_up(H, 8) * lane_pad(D_out)) * w_item      # weights
        + 2 * 8 * (lane_pad(H) + lane_pad(D_out)) * 4             # biases
        + _round_up(tm, 8) * (lane_pad(H) + lane_pad(D_out)) * 4  # h / y f32
    )
    # 2x headroom, never below 32 MiB, never above 56 MiB (< v7x 64 MiB phys).
    vmem_limit = int(min(max(32 * 1024 * 1024, 2 * vmem_est), 56 * 1024 * 1024))

    flops = 2 * b_pad * (D_in * H + H * D_out)
    bytes_accessed = (
        b_pad * D_in * x_item                               # x read
        + (D_in * H + H * D_out) * w_item                   # weights, read once
        + (H + D_out) * 4                                   # biases
        + b_pad * D_out * o_item                            # output write
    )

    out = pl.pallas_call(
        encoder_kernel,
        out_shape=jax.ShapeDtypeStruct((b_pad, D_out), out_dtype),
        grid_spec=pltpu.PrefetchScalarGridSpec(
            num_scalar_prefetch=0,
            grid=grid,
            in_specs=[
                # x: tiled over the batch grid axis (double-buffered by Pallas).
                pl.BlockSpec((tm, D_in), lambda i: (i, 0)),
                # Weights / biases: constant block index -> VMEM-resident,
                # DMA'd once for the whole grid.
                pl.BlockSpec((D_in, H), lambda i: (0, 0)),
                pl.BlockSpec((1, H), lambda i: (0, 0)),
                pl.BlockSpec((H, D_out), lambda i: (0, 0)),
                pl.BlockSpec((1, D_out), lambda i: (0, 0)),
            ],
            out_specs=pl.BlockSpec((tm, D_out), lambda i: (i, 0)),
        ),
        compiler_params=pltpu.CompilerParams(
            # Batch axis is embarrassingly parallel -> shard across the two
            # TensorCores on v7x; near-zero effect (harmless) on v5e/v6e.
            dimension_semantics=("parallel",),
            vmem_limit_bytes=vmem_limit,
        ),
        cost_estimate=pl.CostEstimate(
            flops=flops, transcendentals=0, bytes_accessed=bytes_accessed),
    )(x, w1, b1_2d, w2, b2_2d)

    return out[:B] if b_pad != B else out


def init_linear_params(key, fan_in, fan_out, dtype=jnp.float32):
    """Deterministic init mimicking torch.nn.Linear (kaiming-uniform-ish)."""
    kw, kb = jax.random.split(key)
    bound = 1.0 / jnp.sqrt(jnp.asarray(fan_in, dtype=jnp.float32))
    # Stored as [fan_in, fan_out] (transposed relative to torch's [out, in]).
    w = jax.random.uniform(kw, (fan_in, fan_out), dtype, -bound, bound)
    b = jax.random.uniform(kb, (fan_out,), dtype, -bound, bound)
    return w, b


def _reference(x, w1, b1, w2, b2):
    return jnp.maximum(jnp.maximum(x @ w1 + b1, 0.0) @ w2 + b2, 0.0)


if __name__ == "__main__":
    # Encoder(D_in=32, H=64, D_out=16) — small shapes consistent with the module.
    # TODO(synk): the `.cuda()` device transfer in forward() has no Pallas
    # equivalent (device placement is handled by JAX) and is intentionally a no-op.
    D_in, H, D_out = 32, 64, 16

    key = jax.random.PRNGKey(0)
    kx, k1, k2, kx2 = jax.random.split(key, 4)
    w1, b1 = init_linear_params(k1, D_in, H)
    w2, b2 = init_linear_params(k2, H, D_out)

    # --- 1) Small-batch pure-f32 check (tight tolerance) ---
    B = 8
    x = jax.random.normal(kx, (B, D_in), jnp.float32)
    out = jax.block_until_ready(
        encoder_forward(x, w1, b1, w2, b2, compute_dtype=None))
    ref = _reference(x, w1, b1, w2, b2)
    assert out.shape == (B, D_out)
    assert jnp.allclose(out, ref, atol=1e-5, rtol=1e-5), "f32 mismatch vs reference"

    # --- 2) Larger batch with the default bf16 streaming path: exercises the
    #        low-waste batch tiling, the >=2-step grid (dual-TC on v7x) and
    #        the pad/slice path; looser tolerance for bf16 operands. ---
    B2 = 1000  # not a multiple of the tile -> exercises pad/slice + 2 steps
    x2 = jax.random.normal(kx2, (B2, D_in), jnp.float32)
    out2 = jax.block_until_ready(encoder_forward(x2, w1, b1, w2, b2))
    ref2 = _reference(x2, w1, b1, w2, b2)
    assert out2.shape == (B2, D_out)
    assert out2.dtype == x2.dtype
    assert jnp.allclose(out2, ref2, atol=5e-2, rtol=5e-2), "bf16 mismatch vs reference"

    print("KERNEL_OK")
</pallas_src>

<mosaic_0001>
module attributes {stable_mosaic.version = 11 : i64} {
  func.func @encoder_kernel(%arg0: i32, %arg1: memref<8x32xf32, #tpu.memory_space<vmem>>, %arg2: memref<32x64xf32, #tpu.memory_space<vmem>>, %arg3: memref<1x64xf32, #tpu.memory_space<vmem>>, %arg4: memref<64x16xf32, #tpu.memory_space<vmem>>, %arg5: memref<1x16xf32, #tpu.memory_space<vmem>>, %arg6: memref<8x16xf32, #tpu.memory_space<vmem>>) attributes {dimension_semantics = [#tpu.dimension_semantics<parallel>], iteration_bounds = array<i64: 1>, scalar_prefetch = 0 : i64, scratch_operands = 0 : i64, tpu.core_type = #tpu.core_type<tc>, window_params = [{transform_indices = @transform_0, window_bounds = array<i64: 8, 32>}, {pipeline_mode = #tpu.pipeline_mode<synchronous>, transform_indices = @transform_1, window_bounds = array<i64: 32, 64>}, {pipeline_mode = #tpu.pipeline_mode<synchronous>, transform_indices = @transform_2, window_bounds = array<i64: 1, 64>}, {pipeline_mode = #tpu.pipeline_mode<synchronous>, transform_indices = @transform_3, window_bounds = array<i64: 64, 16>}, {pipeline_mode = #tpu.pipeline_mode<synchronous>, transform_indices = @transform_4, window_bounds = array<i64: 1, 16>}, {transform_indices = @transform_5, window_bounds = array<i64: 8, 16>}]} {
    %c0 = arith.constant 0 : index
    %c0_0 = arith.constant 0 : index
    %0 = vector.load %arg1[%c0, %c0_0] : memref<8x32xf32, #tpu.memory_space<vmem>>, vector<8x32xf32>
    %c0_1 = arith.constant 0 : index
    %c0_2 = arith.constant 0 : index
    %1 = vector.load %arg2[%c0_1, %c0_2] : memref<32x64xf32, #tpu.memory_space<vmem>>, vector<32x64xf32>
    %cst = arith.constant dense<0.000000e+00> : vector<8x64xf32>
    %2 = tpu.matmul %0, %1, %cst {dimension_numbers = #tpu.dot_dimension_numbers<[1], [0], [0], [1], [0, 0, 1, 1], [], []>} : vector<8x32xf32>, vector<32x64xf32>, vector<8x64xf32> -> vector<8x64xf32>
    %c0_3 = arith.constant 0 : index
    %c0_4 = arith.constant 0 : index
    %3 = vector.load %arg3[%c0_3, %c0_4] : memref<1x64xf32, #tpu.memory_space<vmem>>, vector<1x64xf32>
    %4 = vector.broadcast %3 : vector<1x64xf32> to vector<8x64xf32>
    %5 = arith.addf %2, %4 : vector<8x64xf32>
    %cst_5 = arith.constant 0.000000e+00 : f32
    %6 = vector.broadcast %cst_5 : f32 to vector<8x64xf32>
    %7 = arith.maximumf %5, %6 : vector<8x64xf32>
    %c0_6 = arith.constant 0 : index
    %c0_7 = arith.constant 0 : index
    %8 = vector.load %arg4[%c0_6, %c0_7] : memref<64x16xf32, #tpu.memory_space<vmem>>, vector<64x16xf32>
    %cst_8 = arith.constant dense<0.000000e+00> : vector<8x16xf32>
    %9 = tpu.matmul %7, %8, %cst_8 {dimension_numbers = #tpu.dot_dimension_numbers<[1], [0], [0], [1], [0, 0, 1, 1], [], []>} : vector<8x64xf32>, vector<64x16xf32>, vector<8x16xf32> -> vector<8x16xf32>
    %c0_9 = arith.constant 0 : index
    %c0_10 = arith.constant 0 : index
    %10 = vector.load %arg5[%c0_9, %c0_10] : memref<1x16xf32, #tpu.memory_space<vmem>>, vector<1x16xf32>
    %11 = vector.broadcast %10 : vector<1x16xf32> to vector<8x16xf32>
    %12 = arith.addf %9, %11 : vector<8x16xf32>
    %cst_11 = arith.constant 0.000000e+00 : f32
    %13 = vector.broadcast %cst_11 : f32 to vector<8x16xf32>
    %14 = arith.maximumf %12, %13 : vector<8x16xf32>
    %c0_12 = arith.constant 0 : index
    %c0_13 = arith.constant 0 : index
    %15 = vector.load %arg6[%c0_12, %c0_13] : memref<8x16xf32, #tpu.memory_space<vmem>>, vector<8x16xf32>
    tpu.vector_store %arg6[%c0_12, %c0_13], %14 {strides = array<i32>} : memref<8x16xf32, #tpu.memory_space<vmem>>, vector<8x16xf32>,
    return
  }
  func.func @transform_0(%arg0: i32) -> (i32, i32) {
    %c0_i32 = arith.constant 0 : i32
    %c0_i32_0 = arith.constant 0 : i32
    return %arg0, %c0_i32 : i32, i32
  }
  func.func @transform_1(%arg0: i32) -> (i32, i32) {
    %c0_i32 = arith.constant 0 : i32
    %c0_i32_0 = arith.constant 0 : i32
    %c0_i32_1 = arith.constant 0 : i32
    return %c0_i32, %c0_i32_0 : i32, i32
  }
  func.func @transform_2(%arg0: i32) -> (i32, i32) {
    %c0_i32 = arith.constant 0 : i32
    %c0_i32_0 = arith.constant 0 : i32
    %c0_i32_1 = arith.constant 0 : i32
    return %c0_i32, %c0_i32_0 : i32, i32
  }
  func.func @transform_3(%arg0: i32) -> (i32, i32) {
    %c0_i32 = arith.constant 0 : i32
    %c0_i32_0 = arith.constant 0 : i32
    %c0_i32_1 = arith.constant 0 : i32
    return %c0_i32, %c0_i32_0 : i32, i32
  }
  func.func @transform_4(%arg0: i32) -> (i32, i32) {
    %c0_i32 = arith.constant 0 : i32
    %c0_i32_0 = arith.constant 0 : i32
    %c0_i32_1 = arith.constant 0 : i32
    return %c0_i32, %c0_i32_0 : i32, i32
  }
  func.func @transform_5(%arg0: i32) -> (i32, i32) {
    %c0_i32 = arith.constant 0 : i32
    %c0_i32_0 = arith.constant 0 : i32
    return %arg0, %c0_i32 : i32, i32
  }
}

</mosaic_0001>

<llo_original>
// kernel: encoder_forward.1
$region0: #{encoder_forward.1}
  #allocation0 [shape = 'u32[]', space=smem, size = 0x4, offset = 0x4, fixed_abs, tag = 'smem constant byte address 0x4 - core index']
  #allocation1 [shape = 'u32[144,128]{1,0:T(1,128)}', space=vmem, size = 0x12000, scoped, tag = 'internal scratch']
  %s0 = inlined_call_operand.vmem [shape: f32[8,32], index: 0, kind: input, shape index: {}]
  %s1 = inlined_call_operand.vmem [shape: f32[32,64], index: 1, kind: input, shape index: {}]
  %s2 = inlined_call_operand.vmem [shape: f32[1,64], index: 2, kind: input, shape index: {}]
  %s3 = inlined_call_operand.vmem [shape: f32[64,16], index: 3, kind: input, shape index: {}]
  %s4 = inlined_call_operand.vmem [shape: f32[1,16], index: 4, kind: input, shape index: {}]
  %s5 = inlined_call_operand.hbm [shape: f32[8,16], index: 5, kind: output, shape index: {}]
  %s6 = sld [smem:[#allocation0]]
  $region30: #{encoder_forward.1} parent=0
    _
  %s8 = ssub.s32 1, %s6
  %s9 = scalar_select 0, %s8, %s6
  $region1: #{encoder_forward.1} parent=0
    #allocation2 [shape = 'u8[4096]{0}', space=vmem, size = 0x1000, scoped, tag = 'output window, operand 0, single buffered']
    #allocation3 [shape = 's32[1]{0}', space=sflag, size = 0x4, scoped, tag = 'scoped memory for encoder_forward.1']
    %10 = vsyncpa [#allocation3], 0
    // Predicated region
    $region2: #{encoder_forward.1} parent=1 // pred_check
      _
    $region3: #{encoder_forward.1} parent=1 // pred_check_branch
      %12 = sbr.rel (0) target = $region5
    $region4: #{encoder_forward.1} parent=1 // pred_region
      _
    $region5: #{encoder_forward.1} parent=1 // pred_fallthru
      _
    // Predicated region
    $region6: #{encoder_forward.1} parent=1 // pred_check
      _
    $region7: #{encoder_forward.1} parent=1 // pred_check_branch
      %14 = sbr.rel (0) target = $region9
    $region8: #{encoder_forward.1} parent=1 // pred_region
      _
    $region9: #{encoder_forward.1} parent=1 // pred_fallthru
      _
    // Predicated region
    $region10: #{encoder_forward.1} parent=1 // pred_check
      _
    $region11: #{encoder_forward.1} parent=1 // pred_check_branch
      %16 = sbr.rel (0) target = $region13
    $region12: #{encoder_forward.1} parent=1 // pred_region
      _
    $region13: #{encoder_forward.1} parent=1 // pred_fallthru
      _
    // Predicated region
    $region14: #{encoder_forward.1} parent=1 // pred_check
      _
    $region15: #{encoder_forward.1} parent=1 // pred_check_branch
      %18 = sbr.rel (0) target = $region17
    $region16: #{encoder_forward.1} parent=1 // pred_region
      _
    $region17: #{encoder_forward.1} parent=1 // pred_fallthru
      _
    // Predicated region
    $region18: #{encoder_forward.1} parent=1 // pred_check
      _
    $region19: #{encoder_forward.1} parent=1 // pred_check_branch
      %20 = sbr.rel (0) target = $region21
    $region20: #{encoder_forward.1} parent=1 // pred_region
      _
    $region21: #{encoder_forward.1} parent=1 // pred_fallthru
      _
    %v21 = vld [vmem:[%s0] sm:$0xff]
    %v22 = vld [vmem:[%s1] sm:$0xff]
    %v23 = vld [vmem:[%s1 + $0x8] sm:$0xff]
    %v24 = vld [vmem:[%s1 + $0x10] sm:$0xff]
    %v25 = vld [vmem:[%s1 + $0x18] sm:$0xff]
    %v26 = vld [vmem:[%s2] sm:$0x1]
    %v28 = vlaneseq
    %v29 = vshrl.u32 %v28, 7
    %v30 = vsub.s32 0, %v29
    %v31 = vrot.slane %v26, %v30
    %vm33 = vcmask 261120
    %v35 = vsel %vm33, %v21, 0
    %37 = vmatprep.subr.mxu0 0.0
    %38 = vmatpush1.msra.mxu0 %v22
    %39 = vmatprep.subr.mxu0 0.0
    %40 = vmatpush1.msra.mxu0 %v23
    %41 = vmatprep.subr.mxu0 0.0
    %42 = vmatpush1.msra.mxu0 %v24
    %43 = vmatprep.subr.mxu0 0.0
    %44 = vmatpush1.msra.mxu0 %v25
    %45 = vmatprep.subr.mxu0 0.0
    %46 = vmatpush1.msra.mxu0 0.0
    %47 = vmatprep.subr.mxu0 0.0
    %48 = vmatpush1.msra.mxu0 0.0
    %49 = vmatprep.subr.mxu0 0.0
    %50 = vmatpush1.msra.mxu0 0.0
    %51 = vmatprep.subr.mxu0 0.0
    %52 = vmatpush1.msra.mxu0 0.0
    %53 = vmatprep.subr.mxu0 0.0
    %54 = vmatpush1.msra.mxu0 0.0
    %55 = vmatprep.subr.mxu0 0.0
    %56 = vmatpush1.msra.mxu0 0.0
    %57 = vmatprep.subr.mxu0 0.0
    %58 = vmatpush1.msra.mxu0 0.0
    %59 = vmatprep.subr.mxu0 0.0
    %60 = vmatpush1.msra.mxu0 0.0
    %61 = vmatprep.subr.mxu0 0.0
    %62 = vmatpush1.msra.mxu0 0.0
    %63 = vmatprep.subr.mxu0 0.0
    %64 = vmatpush1.msra.mxu0 0.0
    %65 = vmatprep.subr.mxu0 0.0
    %66 = vmatpush1.msra.mxu0 0.0
    %67 = vmatprep.subr.mxu0 0.0
    %68 = vmatpush1.msra.mxu0 0.0
    %69 = vmatprep.subr.mxu0 0.0
    %70 = vmatpush1.msra.mxu0 0.0
    %71 = vmatprep.subr.mxu0 0.0
    %72 = vmatpush1.msra.mxu0 0.0
    %73 = vmatprep.subr.mxu0 0.0
    %74 = vmatpush1.msra.mxu0 0.0
    %75 = vmatprep.subr.mxu0 0.0
    %76 = vmatpush1.msra.mxu0 0.0
    %77 = vmatprep.subr.mxu0 0.0
    %78 = vmatpush1.msra.mxu0 0.0
    %79 = vmatprep.subr.mxu0 0.0
    %80 = vmatpush1.msra.mxu0 0.0
    %81 = vmatprep.subr.mxu0 0.0
    %82 = vmatpush1.msra.mxu0 0.0
    %83 = vmatprep.subr.mxu0 0.0
    %84 = vmatpush1.msra.mxu0 0.0
    %85 = vmatprep.subr.mxu0 0.0
    %86 = vmatpush1.msra.mxu0 0.0
    %87 = vmatprep.subr.mxu0 0.0
    %88 = vmatpush1.msra.mxu0 0.0
    %89 = vmatprep.subr.mxu0 0.0
    %90 = vmatpush1.msra.mxu0 0.0
    %91 = vmatprep.subr.mxu0 0.0
    %92 = vmatpush1.msra.mxu0 0.0
    %93 = vmatprep.subr.mxu0 0.0
    %94 = vmatpush1.msra.mxu0 0.0
    %95 = vmatprep.subr.mxu0 0.0
    %96 = vmatpush1.msra.mxu0 0.0
    %97 = vmatprep.subr.mxu0 0.0
    %98 = vmatpush1.msra.mxu0 0.0
    %99 = vmatprep.subr.mxu0 0.0
    %100 = vmatpush1.msra.mxu0 0.0
    %101 = vmatprep.mubr.f32.mxu0 0.0
    %102 = vmatmul.mubr.f32.gmra.mrb[0].mxu0 %v35
    %v103 = vpop.f32.mrb[0].mxu0
    %v104 = vadd.f32 %v31, %v103
    %v105 = vpop.f32.mrb[0].mxu0
    %106 = vdwg.mxu0
    %v107 = vmax.f32 %v104, 0.0
    %v108 = vld [vmem:[%s3] sm:$0xff]
    %v109 = vld [vmem:[%s3 + $0x8] sm:$0xff]
    %v110 = vld [vmem:[%s3 + $0x10] sm:$0xff]
    %v111 = vld [vmem:[%s3 + $0x18] sm:$0xff]
    %v112 = vld [vmem:[%s3 + $0x20] sm:$0xff]
    %v113 = vld [vmem:[%s3 + $0x28] sm:$0xff]
    %v114 = vld [vmem:[%s3 + $0x30] sm:$0xff]
    %v115 = vld [vmem:[%s3 + $0x38] sm:$0xff]
    %v116 = vld [vmem:[%s4] sm:$0x1]
    %v118 = vlaneseq
    %v119 = vshrl.u32 %v118, 7
    %v120 = vsub.s32 0, %v119
    %v121 = vrot.slane %v116, %v120
    %vm123 = vcmask 523264
    %v125 = vsel %vm123, %v107, 0
    %127 = vmatprep.subr.mxu0 0.0
    %128 = vmatpush1.msra.mxu0 %v108
    %129 = vmatprep.subr.mxu0 0.0
    %130 = vmatpush1.msra.mxu0 %v109
    %131 = vmatprep.subr.mxu0 0.0
    %132 = vmatpush1.msra.mxu0 %v110
    %133 = vmatprep.subr.mxu0 0.0
    %134 = vmatpush1.msra.mxu0 %v111
    %135 = vmatprep.subr.mxu0 0.0
    %136 = vmatpush1.msra.mxu0 %v112
    %137 = vmatprep.subr.mxu0 0.0
    %138 = vmatpush1.msra.mxu0 %v113
    %139 = vmatprep.subr.mxu0 0.0
    %140 = vmatpush1.msra.mxu0 %v114
    %141 = vmatprep.subr.mxu0 0.0
    %142 = vmatpush1.msra.mxu0 %v115
    %143 = vmatprep.subr.mxu0 0.0
    %144 = vmatpush1.msra.mxu0 0.0
    %145 = vmatprep.subr.mxu0 0.0
    %146 = vmatpush1.msra.mxu0 0.0
    %147 = vmatprep.subr.mxu0 0.0
    %148 = vmatpush1.msra.mxu0 0.0
    %149 = vmatprep.subr.mxu0 0.0
    %150 = vmatpush1.msra.mxu0 0.0
    %151 = vmatprep.subr.mxu0 0.0
    %152 = vmatpush1.msra.mxu0 0.0
    %153 = vmatprep.subr.mxu0 0.0
    %154 = vmatpush1.msra.mxu0 0.0
    %155 = vmatprep.subr.mxu0 0.0
    %156 = vmatpush1.msra.mxu0 0.0
    %157 = vmatprep.subr.mxu0 0.0
    %158 = vmatpush1.msra.mxu0 0.0
    %159 = vmatprep.subr.mxu0 0.0
    %160 = vmatpush1.msra.mxu0 0.0
    %161 = vmatprep.subr.mxu0 0.0
    %162 = vmatpush1.msra.mxu0 0.0
    %163 = vmatprep.subr.mxu0 0.0
    %164 = vmatpush1.msra.mxu0 0.0
    %165 = vmatprep.subr.mxu0 0.0
    %166 = vmatpush1.msra.mxu0 0.0
    %167 = vmatprep.subr.mxu0 0.0
    %168 = vmatpush1.msra.mxu0 0.0
    %169 = vmatprep.subr.mxu0 0.0
    %170 = vmatpush1.msra.mxu0 0.0
    %171 = vmatprep.subr.mxu0 0.0
    %172 = vmatpush1.msra.mxu0 0.0
    %173 = vmatprep.subr.mxu0 0.0
    %174 = vmatpush1.msra.mxu0 0.0
    %175 = vmatprep.subr.mxu0 0.0
    %176 = vmatpush1.msra.mxu0 0.0
    %177 = vmatprep.subr.mxu0 0.0
    %178 = vmatpush1.msra.mxu0 0.0
    %179 = vmatprep.subr.mxu0 0.0
    %180 = vmatpush1.msra.mxu0 0.0
    %181 = vmatprep.subr.mxu0 0.0
    %182 = vmatpush1.msra.mxu0 0.0
    %183 = vmatprep.subr.mxu0 0.0
    %184 = vmatpush1.msra.mxu0 0.0
    %185 = vmatprep.subr.mxu0 0.0
    %186 = vmatpush1.msra.mxu0 0.0
    %187 = vmatprep.subr.mxu0 0.0
    %188 = vmatpush1.msra.mxu0 0.0
    %189 = vmatprep.subr.mxu0 0.0
    %190 = vmatpush1.msra.mxu0 0.0
    %191 = vmatprep.mubr.f32.mxu0 0.0
    %192 = vmatmul.mubr.f32.gmra.mrb[0].mxu0 %v125
    %v193 = vpop.f32.mrb[0].mxu0
    %v194 = vadd.f32 %v121, %v193
    %v195 = vpop.f32.mrb[0].mxu0
    %196 = vdwg.mxu0
    %v197 = vmax.f32 %v194, 0.0
    %vm198 = vcmask 130048
    %199 = vst.msk [vmem:[#allocation2] sm:$0xff] %vm198, %v197
    // Predicated region
    $region22: #{encoder_forward.1} parent=1 // pred_check
      _
    $region23: #{encoder_forward.1} parent=1 // pred_check_branch
      %201 = sbr.rel (0) target = $region25
    $region24: #{encoder_forward.1} parent=1 // pred_region
      %s203 = ssub.s32 128, 128
      %204 = vsyncadd [#allocation3], %s203
      %s206 = sshll.u32 [#allocation2], 4
      %s207 = int_to_ptr.vmem [resolvable:$true] %s206
      %209 = dma.vmem_to_hbm [thread:$0]  %s207, 128, %s5, [#allocation3]
    $region25: #{encoder_forward.1} parent=1 // pred_fallthru
      _
    // Predicated region
    $region26: #{encoder_forward.1} parent=1 // pred_check
      _
    $region27: #{encoder_forward.1} parent=1 // pred_check_branch
      %211 = sbr.rel (0) target = $region29
    $region28: #{encoder_forward.1} parent=1 // pred_region
      %212 = dma.done [#allocation3], 128
    $region29: #{encoder_forward.1} parent=1 // pred_fallthru
      _
    %213 = vsyncpa [#allocation3], 1

</llo_original>
